<compile_context>
chip_gen: v7x
topology: tpu7x:2x2x1
jax: 0.10.0
libtpu: 0.0.40
codegen_flags: <defaults>
</compile_context>

<pallas_src>
import functools

import jax
import jax.numpy as jnp
from jax.experimental import pallas as pl
from jax.experimental.pallas import tpu as pltpu

_NEG = -1e30


def _leaky(x, slope):
    return jnp.where(x > 0, x, slope * x)


def _gatv2_kernel(h_ref, wf_ref, bf_ref, attn_ref, adj_ref, out_ref, fdst_scr,
                  *, num_heads, out_feats, tile_nd):
    """One GATv2Conv layer (+ model LeakyReLU) for one tile of destination nodes."""
    hd = num_heads * out_feats

    # --- fused projection: ONE matmul producing [feat_src || feat_dst] ---------
    proj = jnp.dot(h_ref[...], wf_ref[...],
                   preferred_element_type=jnp.float32) + bf_ref[...]   # (N, 2*HD)
    fsrc = proj[:, :hd]                                                # (N_src, HD)
    fdst_scr[...] = proj[:, hd:]                                       # park dst half in VMEM

    # destination rows owned by this grid step (tile_nd-aligned dynamic slice)
    row0 = pl.multiple_of(pl.program_id(0) * tile_nd, tile_nd)
    fdst = fdst_scr[pl.ds(row0, tile_nd), :]                           # (T, HD)

    adj = adj_ref[...]                                                 # (T, N_src) 0/1 mask
    adj_pos = adj > 0                                                  # hoisted out of head loop

    # --- head-batched attention logits (computed once over the full HD lanes) --
    # z[t, i, h*D+d] = attn[h, d] * leaky_relu(fdst[t, h*D+d] + fsrc[i, h*D+d], 0.2)
    z = _leaky(fdst[:, None, :] + fsrc[None, :, :], 0.2) * attn_ref[...][None, :, :]

    # --- per-head softmax + aggregation (tiny static unroll) -------------------
    head_outs = []
    for hh in range(num_heads):
        lo = hh * out_feats
        e = jnp.sum(z[:, :, lo:lo + out_feats], axis=-1)               # (T, N_src) logits
        e = jnp.where(adj_pos, e, _NEG)                                # mask non-edges
        m = jnp.max(e, axis=-1, keepdims=True)
        p = jnp.exp(e - m) * adj                                       # assumes 0/1 adjacency
        denom = jnp.sum(p, axis=-1, keepdims=True)
        inv = pl.reciprocal(jnp.where(denom > 0, denom, 1.0), approx=True)  # EUP, not VPU
        a = p * inv                                                    # zero in-degree -> 0 row
        # message aggregation on the MXU: (T, N_src) @ (N_src, D)
        head_outs.append(jnp.dot(a, fsrc[:, lo:lo + out_feats],
                                 preferred_element_type=jnp.float32))

    # single lane-dense store (post model-level LeakyReLU, slope 0.01)
    out_tile = jnp.concatenate(head_outs, axis=-1)                     # (T, HD)
    out_ref[...] = _leaky(out_tile, 0.01).astype(out_ref.dtype)


def gatv2_layer(h, params, adj_ds, num_heads, out_feats, tile_nd=None):
    n, f_in = h.shape
    hd = num_heads * out_feats

    # fuse parameters outside the kernel (plain JAX, happens once)
    w_fused = jnp.concatenate([params["w_src"], params["w_dst"]], axis=1)   # (F_in, 2*HD)
    b_fused = jnp.concatenate([params["b_src"], params["b_dst"]], axis=1)   # (1, 2*HD)
    attn_flat = params["attn"].reshape(1, hd)                               # (1, HD)

    if tile_nd is None:
        tile_nd = n if n <= 128 else 128
    assert n % tile_nd == 0, "node count must be divisible by the dst tile size"
    grid = (n // tile_nd,)

    kernel = functools.partial(_gatv2_kernel, num_heads=num_heads,
                               out_feats=out_feats, tile_nd=tile_nd)

    return pl.pallas_call(
        kernel,
        out_shape=jax.ShapeDtypeStruct((n, hd), jnp.float32),
        grid=grid,
        in_specs=[
            pl.BlockSpec((n, f_in), lambda i: (0, 0)),         # node features (resident)
            pl.BlockSpec((f_in, 2 * hd), lambda i: (0, 0)),    # fused W_src||W_dst
            pl.BlockSpec((1, 2 * hd), lambda i: (0, 0)),       # fused bias
            pl.BlockSpec((1, hd), lambda i: (0, 0)),           # attention vectors (flattened)
            pl.BlockSpec((tile_nd, n), lambda i: (i, 0)),      # adjacency dst-tile (pipelined)
        ],
        out_specs=pl.BlockSpec((tile_nd, hd), lambda i: (i, 0)),
        scratch_shapes=[pltpu.VMEM((n, hd), jnp.float32)],     # dst-half of projection
        compiler_params=pltpu.CompilerParams(
            dimension_semantics=("parallel",)),                # shards dst tiles across TCs (v7x)
    )(h, w_fused, b_fused, attn_flat, adj_ds)


def gatv2_ref(h, p, adj_ds, num_heads, out_feats):
    """Pure-JAX reference with identical math, for correctness checking."""
    fsrc = h @ p["w_src"] + p["b_src"][0]
    fdst = h @ p["w_dst"] + p["b_dst"][0]
    fsrc3 = fsrc.reshape(-1, num_heads, out_feats)
    fdst3 = fdst.reshape(-1, num_heads, out_feats)
    s = fdst3[:, None] + fsrc3[None, :]                                  # (Nd, Ns, H, D)
    e = jnp.sum(_leaky(s, 0.2) * p["attn"][None, None], axis=-1)         # (Nd, Ns, H)
    e = jnp.where(adj_ds[:, :, None] > 0, e, _NEG)
    m = jnp.max(e, axis=1, keepdims=True)
    pm = jnp.exp(e - m) * adj_ds[:, :, None]
    denom = jnp.sum(pm, axis=1, keepdims=True)
    a = pm / jnp.where(denom > 0, denom, 1.0)
    out = jnp.einsum("jih,ihd->jhd", a, fsrc3)
    return _leaky(out, 0.01).reshape(-1, num_heads * out_feats)


def init_gatv2_params(key, in_feats, out_feats, num_heads):
    hd = out_feats * num_heads
    k1, k2, k3, k4, k5 = jax.random.split(key, 5)
    scale = 0.1
    return {
        "w_src": scale * jax.random.normal(k1, (in_feats, hd), jnp.float32),
        "b_src": scale * jax.random.normal(k2, (1, hd), jnp.float32),
        "w_dst": scale * jax.random.normal(k3, (in_feats, hd), jnp.float32),
        "b_dst": scale * jax.random.normal(k4, (1, hd), jnp.float32),
        "attn": scale * jax.random.normal(k5, (num_heads, out_feats), jnp.float32),
    }


def my_gat_model_forward(adj_ds, h, params1, params2, cfg):
    """MyGatModel(layer_num=2).forward(g, h)."""
    h1 = gatv2_layer(h, params1, adj_ds, cfg["first_heads"], cfg["first_out_feats"])
    # conv1 output is (N, H1, D1) then activation then reshape(N, -1):
    # the kernel already emits the flattened (N, H1*D1) slab post-activation.
    h2 = gatv2_layer(h1, params2, adj_ds, cfg["second_heads"], cfg["second_out_dim"])
    # conv2 output (after activation) keeps the (N, H2, D2) shape, as in PyTorch.
    return h2.reshape(h2.shape[0], cfg["second_heads"], cfg["second_out_dim"])


if __name__ == "__main__":
    cfg = dict(layer_num=2, first_in_feats=16, first_out_feats=8, first_heads=4,
               second_out_dim=8, second_heads=2)
    num_nodes = 8

    key = jax.random.PRNGKey(0)
    k_h, k_adj, k_p1, k_p2 = jax.random.split(key, 4)

    h = jax.random.normal(k_h, (num_nodes, cfg["first_in_feats"]), jnp.float32)

    # adjacency in (dst, src) orientation; random edges + self loops (0/1 mask)
    adj_ds = (jax.random.uniform(k_adj, (num_nodes, num_nodes)) < 0.4).astype(jnp.float32)
    adj_ds = jnp.maximum(adj_ds, jnp.eye(num_nodes, dtype=jnp.float32))

    params1 = init_gatv2_params(k_p1, cfg["first_in_feats"],
                                cfg["first_out_feats"], cfg["first_heads"])
    params2 = init_gatv2_params(k_p2, cfg["first_out_feats"] * cfg["first_heads"],
                                cfg["second_out_dim"], cfg["second_heads"])

    out = my_gat_model_forward(adj_ds, h, params1, params2, cfg)
    out = jax.block_until_ready(out)

    # pure-JAX reference check (tolerance loosened slightly for the approximate
    # EUP reciprocal used in the in-kernel softmax normalization)
    r1 = gatv2_ref(h, params1, adj_ds, cfg["first_heads"], cfg["first_out_feats"])
    r2 = gatv2_ref(r1, params2, adj_ds, cfg["second_heads"], cfg["second_out_dim"])
    ref = r2.reshape(num_nodes, cfg["second_heads"], cfg["second_out_dim"])

    assert out.shape == (num_nodes, cfg["second_heads"], cfg["second_out_dim"])
    assert jnp.allclose(out, ref, atol=1e-2, rtol=1e-2), "mismatch vs reference"

    print("KERNEL_OK")
</pallas_src>

<mosaic_0001>
module attributes {stable_mosaic.version = 11 : i64} {
  func.func @_gatv2_kernel(%arg0: i32, %arg1: memref<8x16xf32, #tpu.memory_space<vmem>>, %arg2: memref<16x64xf32, #tpu.memory_space<vmem>>, %arg3: memref<1x64xf32, #tpu.memory_space<vmem>>, %arg4: memref<1x32xf32, #tpu.memory_space<vmem>>, %arg5: memref<8x8xf32, #tpu.memory_space<vmem>>, %arg6: memref<8x32xf32, #tpu.memory_space<vmem>>, %arg7: memref<8x32xf32, #tpu.memory_space<vmem>>) attributes {dimension_semantics = [#tpu.dimension_semantics<parallel>], iteration_bounds = array<i64: 1>, scalar_prefetch = 0 : i64, scratch_operands = 1 : i64, tpu.core_type = #tpu.core_type<tc>, window_params = [{pipeline_mode = #tpu.pipeline_mode<synchronous>, transform_indices = @transform_0, window_bounds = array<i64: 8, 16>}, {pipeline_mode = #tpu.pipeline_mode<synchronous>, transform_indices = @transform_1, window_bounds = array<i64: 16, 64>}, {pipeline_mode = #tpu.pipeline_mode<synchronous>, transform_indices = @transform_2, window_bounds = array<i64: 1, 64>}, {pipeline_mode = #tpu.pipeline_mode<synchronous>, transform_indices = @transform_3, window_bounds = array<i64: 1, 32>}, {transform_indices = @transform_4, window_bounds = array<i64: 8, 8>}, {transform_indices = @transform_5, window_bounds = array<i64: 8, 32>}]} {
    %c0 = arith.constant 0 : index
    %c0_0 = arith.constant 0 : index
    %0 = vector.load %arg1[%c0, %c0_0] : memref<8x16xf32, #tpu.memory_space<vmem>>, vector<8x16xf32>
    %c0_1 = arith.constant 0 : index
    %c0_2 = arith.constant 0 : index
    %1 = vector.load %arg2[%c0_1, %c0_2] : memref<16x64xf32, #tpu.memory_space<vmem>>, vector<16x64xf32>
    %cst = arith.constant dense<0.000000e+00> : vector<8x64xf32>
    %2 = tpu.matmul %0, %1, %cst {dimension_numbers = #tpu.dot_dimension_numbers<[1], [0], [0], [1], [0, 0, 1, 1], [], []>} : vector<8x16xf32>, vector<16x64xf32>, vector<8x64xf32> -> vector<8x64xf32>
    %c0_3 = arith.constant 0 : index
    %c0_4 = arith.constant 0 : index
    %3 = vector.load %arg3[%c0_3, %c0_4] : memref<1x64xf32, #tpu.memory_space<vmem>>, vector<1x64xf32>
    %4 = vector.broadcast %3 : vector<1x64xf32> to vector<8x64xf32>
    %5 = arith.addf %2, %4 : vector<8x64xf32>
    %6 = vector.extract_strided_slice %5 {offsets = [0, 0], sizes = [8, 32], strides = [1, 1]} : vector<8x64xf32> to vector<8x32xf32>
    %7 = vector.extract_strided_slice %5 {offsets = [0, 32], sizes = [8, 32], strides = [1, 1]} : vector<8x64xf32> to vector<8x32xf32>
    %c0_5 = arith.constant 0 : index
    %c0_6 = arith.constant 0 : index
    %8 = vector.load %arg7[%c0_5, %c0_6] : memref<8x32xf32, #tpu.memory_space<vmem>>, vector<8x32xf32>
    tpu.vector_store %arg7[%c0_5, %c0_6], %7 {strides = array<i32>} : memref<8x32xf32, #tpu.memory_space<vmem>>, vector<8x32xf32>,
    %c8_i32 = arith.constant 8 : i32
    %9 = arith.muli %arg0, %c8_i32 : i32
    %10 = tpu.assume_multiple %9, 8 : i32
    %11 = arith.index_cast %10 : i32 to index
    %c0_7 = arith.constant 0 : index
    %12 = vector.load %arg7[%11, %c0_7] : memref<8x32xf32, #tpu.memory_space<vmem>>, vector<8x32xf32>
    %c0_8 = arith.constant 0 : index
    %c0_9 = arith.constant 0 : index
    %13 = vector.load %arg5[%c0_8, %c0_9] : memref<8x8xf32, #tpu.memory_space<vmem>>, vector<8x8xf32>
    %cst_10 = arith.constant 0.000000e+00 : f32
    %14 = vector.broadcast %cst_10 : f32 to vector<8x8xf32>
    %15 = arith.cmpf ogt, %13, %14 : vector<8x8xf32>
    %16 = vector.shape_cast %12 : vector<8x32xf32> to vector<8x1x32xf32>
    %17 = vector.shape_cast %6 : vector<8x32xf32> to vector<1x8x32xf32>
    %18 = vector.broadcast %16 : vector<8x1x32xf32> to vector<8x8x32xf32>
    %19 = vector.broadcast %17 : vector<1x8x32xf32> to vector<8x8x32xf32>
    %20 = arith.addf %18, %19 : vector<8x8x32xf32>
    %cst_11 = arith.constant 0.000000e+00 : f32
    %21 = vector.broadcast %cst_11 : f32 to vector<8x8x32xf32>
    %22 = arith.cmpf ogt, %20, %21 : vector<8x8x32xf32>
    %cst_12 = arith.constant 2.000000e-01 : f32
    %23 = vector.broadcast %cst_12 : f32 to vector<8x8x32xf32>
    %24 = arith.mulf %23, %20 : vector<8x8x32xf32>
    %25 = arith.select %22, %20, %24 : vector<8x8x32xi1>, vector<8x8x32xf32>
    %c0_13 = arith.constant 0 : index
    %c0_14 = arith.constant 0 : index
    %26 = vector.load %arg4[%c0_13, %c0_14] : memref<1x32xf32, #tpu.memory_space<vmem>>, vector<1x32xf32>
    %27 = vector.shape_cast %26 : vector<1x32xf32> to vector<1x1x32xf32>
    %28 = vector.broadcast %27 : vector<1x1x32xf32> to vector<8x8x32xf32>
    %29 = arith.mulf %25, %28 : vector<8x8x32xf32>
    %30 = vector.extract_strided_slice %29 {offsets = [0, 0, 0], sizes = [8, 8, 8], strides = [1, 1, 1]} : vector<8x8x32xf32> to vector<8x8x8xf32>
    %cst_15 = arith.constant dense<0.000000e+00> : vector<8x8xf32>
    %31 = vector.multi_reduction <add>, %30, %cst_15 [2] : vector<8x8x8xf32> to vector<8x8xf32>
    %cst_16 = arith.constant -1.000000e+30 : f32
    %32 = vector.broadcast %cst_16 : f32 to vector<8x8xf32>
    %33 = arith.select %15, %31, %32 : vector<8x8xi1>, vector<8x8xf32>
    %cst_17 = arith.constant dense<0xFF800000> : vector<8xf32>
    %34 = vector.multi_reduction <maximumf>, %33, %cst_17 [1] : vector<8x8xf32> to vector<8xf32>
    %35 = vector.shape_cast %34 : vector<8xf32> to vector<8x1xf32>
    %36 = vector.broadcast %35 : vector<8x1xf32> to vector<8x8xf32>
    %37 = arith.subf %33, %36 : vector<8x8xf32>
    %38 = math.exp %37 : vector<8x8xf32>
    %39 = arith.mulf %38, %13 : vector<8x8xf32>
    %cst_18 = arith.constant dense<0.000000e+00> : vector<8xf32>
    %40 = vector.multi_reduction <add>, %39, %cst_18 [1] : vector<8x8xf32> to vector<8xf32>
    %41 = vector.shape_cast %40 : vector<8xf32> to vector<8x1xf32>
    %cst_19 = arith.constant 0.000000e+00 : f32
    %42 = vector.broadcast %cst_19 : f32 to vector<8x1xf32>
    %43 = arith.cmpf ogt, %41, %42 : vector<8x1xf32>
    %cst_20 = arith.constant 1.000000e+00 : f32
    %44 = vector.broadcast %cst_20 : f32 to vector<8x1xf32>
    %45 = arith.select %43, %41, %44 : vector<8x1xi1>, vector<8x1xf32>
    %46 = tpu.reciprocal %45 {approx = true} : vector<8x1xf32> -> vector<8x1xf32>
    %47 = vector.broadcast %46 : vector<8x1xf32> to vector<8x8xf32>
    %48 = arith.mulf %39, %47 : vector<8x8xf32>
    %49 = vector.extract_strided_slice %6 {offsets = [0, 0], sizes = [8, 8], strides = [1, 1]} : vector<8x32xf32> to vector<8x8xf32>
    %cst_21 = arith.constant dense<0.000000e+00> : vector<8x8xf32>
    %50 = tpu.matmul %48, %49, %cst_21 {dimension_numbers = #tpu.dot_dimension_numbers<[1], [0], [0], [1], [0, 0, 1, 1], [], []>} : vector<8x8xf32>, vector<8x8xf32>, vector<8x8xf32> -> vector<8x8xf32>
    %51 = vector.extract_strided_slice %29 {offsets = [0, 0, 8], sizes = [8, 8, 8], strides = [1, 1, 1]} : vector<8x8x32xf32> to vector<8x8x8xf32>
    %cst_22 = arith.constant dense<0.000000e+00> : vector<8x8xf32>
    %52 = vector.multi_reduction <add>, %51, %cst_22 [2] : vector<8x8x8xf32> to vector<8x8xf32>
    %cst_23 = arith.constant -1.000000e+30 : f32
    %53 = vector.broadcast %cst_23 : f32 to vector<8x8xf32>
    %54 = arith.select %15, %52, %53 : vector<8x8xi1>, vector<8x8xf32>
    %cst_24 = arith.constant dense<0xFF800000> : vector<8xf32>
    %55 = vector.multi_reduction <maximumf>, %54, %cst_24 [1] : vector<8x8xf32> to vector<8xf32>
    %56 = vector.shape_cast %55 : vector<8xf32> to vector<8x1xf32>
    %57 = vector.broadcast %56 : vector<8x1xf32> to vector<8x8xf32>
    %58 = arith.subf %54, %57 : vector<8x8xf32>
    %59 = math.exp %58 : vector<8x8xf32>
    %60 = arith.mulf %59, %13 : vector<8x8xf32>
    %cst_25 = arith.constant dense<0.000000e+00> : vector<8xf32>
    %61 = vector.multi_reduction <add>, %60, %cst_25 [1] : vector<8x8xf32> to vector<8xf32>
    %62 = vector.shape_cast %61 : vector<8xf32> to vector<8x1xf32>
    %cst_26 = arith.constant 0.000000e+00 : f32
    %63 = vector.broadcast %cst_26 : f32 to vector<8x1xf32>
    %64 = arith.cmpf ogt, %62, %63 : vector<8x1xf32>
    %cst_27 = arith.constant 1.000000e+00 : f32
    %65 = vector.broadcast %cst_27 : f32 to vector<8x1xf32>
    %66 = arith.select %64, %62, %65 : vector<8x1xi1>, vector<8x1xf32>
    %67 = tpu.reciprocal %66 {approx = true} : vector<8x1xf32> -> vector<8x1xf32>
    %68 = vector.broadcast %67 : vector<8x1xf32> to vector<8x8xf32>
    %69 = arith.mulf %60, %68 : vector<8x8xf32>
    %70 = vector.extract_strided_slice %6 {offsets = [0, 8], sizes = [8, 8], strides = [1, 1]} : vector<8x32xf32> to vector<8x8xf32>
    %cst_28 = arith.constant dense<0.000000e+00> : vector<8x8xf32>
    %71 = tpu.matmul %69, %70, %cst_28 {dimension_numbers = #tpu.dot_dimension_numbers<[1], [0], [0], [1], [0, 0, 1, 1], [], []>} : vector<8x8xf32>, vector<8x8xf32>, vector<8x8xf32> -> vector<8x8xf32>
    %72 = vector.extract_strided_slice %29 {offsets = [0, 0, 16], sizes = [8, 8, 8], strides = [1, 1, 1]} : vector<8x8x32xf32> to vector<8x8x8xf32>
    %cst_29 = arith.constant dense<0.000000e+00> : vector<8x8xf32>
    %73 = vector.multi_reduction <add>, %72, %cst_29 [2] : vector<8x8x8xf32> to vector<8x8xf32>
    %cst_30 = arith.constant -1.000000e+30 : f32
    %74 = vector.broadcast %cst_30 : f32 to vector<8x8xf32>
    %75 = arith.select %15, %73, %74 : vector<8x8xi1>, vector<8x8xf32>
    %cst_31 = arith.constant dense<0xFF800000> : vector<8xf32>
    %76 = vector.multi_reduction <maximumf>, %75, %cst_31 [1] : vector<8x8xf32> to vector<8xf32>
    %77 = vector.shape_cast %76 : vector<8xf32> to vector<8x1xf32>
    %78 = vector.broadcast %77 : vector<8x1xf32> to vector<8x8xf32>
    %79 = arith.subf %75, %78 : vector<8x8xf32>
    %80 = math.exp %79 : vector<8x8xf32>
    %81 = arith.mulf %80, %13 : vector<8x8xf32>
    %cst_32 = arith.constant dense<0.000000e+00> : vector<8xf32>
    %82 = vector.multi_reduction <add>, %81, %cst_32 [1] : vector<8x8xf32> to vector<8xf32>
    %83 = vector.shape_cast %82 : vector<8xf32> to vector<8x1xf32>
    %cst_33 = arith.constant 0.000000e+00 : f32
    %84 = vector.broadcast %cst_33 : f32 to vector<8x1xf32>
    %85 = arith.cmpf ogt, %83, %84 : vector<8x1xf32>
    %cst_34 = arith.constant 1.000000e+00 : f32
    %86 = vector.broadcast %cst_34 : f32 to vector<8x1xf32>
    %87 = arith.select %85, %83, %86 : vector<8x1xi1>, vector<8x1xf32>
    %88 = tpu.reciprocal %87 {approx = true} : vector<8x1xf32> -> vector<8x1xf32>
    %89 = vector.broadcast %88 : vector<8x1xf32> to vector<8x8xf32>
    %90 = arith.mulf %81, %89 : vector<8x8xf32>
    %91 = vector.extract_strided_slice %6 {offsets = [0, 16], sizes = [8, 8], strides = [1, 1]} : vector<8x32xf32> to vector<8x8xf32>
    %cst_35 = arith.constant dense<0.000000e+00> : vector<8x8xf32>
    %92 = tpu.matmul %90, %91, %cst_35 {dimension_numbers = #tpu.dot_dimension_numbers<[1], [0], [0], [1], [0, 0, 1, 1], [], []>} : vector<8x8xf32>, vector<8x8xf32>, vector<8x8xf32> -> vector<8x8xf32>
    %93 = vector.extract_strided_slice %29 {offsets = [0, 0, 24], sizes = [8, 8, 8], strides = [1, 1, 1]} : vector<8x8x32xf32> to vector<8x8x8xf32>
    %cst_36 = arith.constant dense<0.000000e+00> : vector<8x8xf32>
    %94 = vector.multi_reduction <add>, %93, %cst_36 [2] : vector<8x8x8xf32> to vector<8x8xf32>
    %cst_37 = arith.constant -1.000000e+30 : f32
    %95 = vector.broadcast %cst_37 : f32 to vector<8x8xf32>
    %96 = arith.select %15, %94, %95 : vector<8x8xi1>, vector<8x8xf32>
    %cst_38 = arith.constant dense<0xFF800000> : vector<8xf32>
    %97 = vector.multi_reduction <maximumf>, %96, %cst_38 [1] : vector<8x8xf32> to vector<8xf32>
    %98 = vector.shape_cast %97 : vector<8xf32> to vector<8x1xf32>
    %99 = vector.broadcast %98 : vector<8x1xf32> to vector<8x8xf32>
    %100 = arith.subf %96, %99 : vector<8x8xf32>
    %101 = math.exp %100 : vector<8x8xf32>
    %102 = arith.mulf %101, %13 : vector<8x8xf32>
    %cst_39 = arith.constant dense<0.000000e+00> : vector<8xf32>
    %103 = vector.multi_reduction <add>, %102, %cst_39 [1] : vector<8x8xf32> to vector<8xf32>
    %104 = vector.shape_cast %103 : vector<8xf32> to vector<8x1xf32>
    %cst_40 = arith.constant 0.000000e+00 : f32
    %105 = vector.broadcast %cst_40 : f32 to vector<8x1xf32>
    %106 = arith.cmpf ogt, %104, %105 : vector<8x1xf32>
    %cst_41 = arith.constant 1.000000e+00 : f32
    %107 = vector.broadcast %cst_41 : f32 to vector<8x1xf32>
    %108 = arith.select %106, %104, %107 : vector<8x1xi1>, vector<8x1xf32>
    %109 = tpu.reciprocal %108 {approx = true} : vector<8x1xf32> -> vector<8x1xf32>
    %110 = vector.broadcast %109 : vector<8x1xf32> to vector<8x8xf32>
    %111 = arith.mulf %102, %110 : vector<8x8xf32>
    %112 = vector.extract_strided_slice %6 {offsets = [0, 24], sizes = [8, 8], strides = [1, 1]} : vector<8x32xf32> to vector<8x8xf32>
    %cst_42 = arith.constant dense<0.000000e+00> : vector<8x8xf32>
    %113 = tpu.matmul %111, %112, %cst_42 {dimension_numbers = #tpu.dot_dimension_numbers<[1], [0], [0], [1], [0, 0, 1, 1], [], []>} : vector<8x8xf32>, vector<8x8xf32>, vector<8x8xf32> -> vector<8x8xf32>
    %114 = tpu.concatenate %50, %71, %92, %113 in 1 : vector<8x8xf32>, vector<8x8xf32>, vector<8x8xf32>, vector<8x8xf32> -> vector<8x32xf32>
    %cst_43 = arith.constant 0.000000e+00 : f32
    %115 = vector.broadcast %cst_43 : f32 to vector<8x32xf32>
    %116 = arith.cmpf ogt, %114, %115 : vector<8x32xf32>
    %cst_44 = arith.constant 0.00999999977 : f32
    %117 = vector.broadcast %cst_44 : f32 to vector<8x32xf32>
    %118 = arith.mulf %117, %114 : vector<8x32xf32>
    %119 = arith.select %116, %114, %118 : vector<8x32xi1>, vector<8x32xf32>
    %c0_45 = arith.constant 0 : index
    %c0_46 = arith.constant 0 : index
    %120 = vector.load %arg6[%c0_45, %c0_46] : memref<8x32xf32, #tpu.memory_space<vmem>>, vector<8x32xf32>
    tpu.vector_store %arg6[%c0_45, %c0_46], %119 {strides = array<i32>} : memref<8x32xf32, #tpu.memory_space<vmem>>, vector<8x32xf32>,
    return
  }
  func.func @transform_0(%arg0: i32) -> (i32, i32) {
    %c0_i32 = arith.constant 0 : i32
    %c0_i32_0 = arith.constant 0 : i32
    %c0_i32_1 = arith.constant 0 : i32
    return %c0_i32, %c0_i32_0 : i32, i32
  }
  func.func @transform_1(%arg0: i32) -> (i32, i32) {
    %c0_i32 = arith.constant 0 : i32
    %c0_i32_0 = arith.constant 0 : i32
    %c0_i32_1 = arith.constant 0 : i32
    return %c0_i32, %c0_i32_0 : i32, i32
  }
  func.func @transform_2(%arg0: i32) -> (i32, i32) {
    %c0_i32 = arith.constant 0 : i32
    %c0_i32_0 = arith.constant 0 : i32
    %c0_i32_1 = arith.constant 0 : i32
    return %c0_i32, %c0_i32_0 : i32, i32
  }
  func.func @transform_3(%arg0: i32) -> (i32, i32) {
    %c0_i32 = arith.constant 0 : i32
    %c0_i32_0 = arith.constant 0 : i32
    %c0_i32_1 = arith.constant 0 : i32
    return %c0_i32, %c0_i32_0 : i32, i32
  }
  func.func @transform_4(%arg0: i32) -> (i32, i32) {
    %c0_i32 = arith.constant 0 : i32
    %c0_i32_0 = arith.constant 0 : i32
    return %arg0, %c0_i32 : i32, i32
  }
  func.func @transform_5(%arg0: i32) -> (i32, i32) {
    %c0_i32 = arith.constant 0 : i32
    %c0_i32_0 = arith.constant 0 : i32
    return %arg0, %c0_i32 : i32, i32
  }
}

</mosaic_0001>

<llo_original>
// kernel: tpu_custom_call.1
$region0: #{tpu_custom_call.1}
  #allocation0 [shape = 'u32[]', space=smem, size = 0x4, offset = 0x4, fixed_abs, tag = 'smem constant byte address 0x4 - core index']
  #allocation1 [shape = 'u32[144,128]{1,0:T(1,128)}', space=vmem, size = 0x12000, scoped, tag = 'internal scratch']
  #allocation2 [shape = 'f32[8,32]{1,0:T(8,128)}', space=vmem, size = 0x1000, scoped, tag = 'scratch operand']
  %s0 = inlined_call_operand.hbm [shape: f32[8,16], index: 0, kind: input, shape index: {}]
  %s1 = inlined_call_operand.hbm [shape: f32[16,64], index: 1, kind: input, shape index: {}]
  %s2 = inlined_call_operand.vmem [shape: f32[1,64], index: 2, kind: input, shape index: {}]
  %s3 = inlined_call_operand.vmem [shape: f32[1,32], index: 3, kind: input, shape index: {}]
  %s4 = inlined_call_operand.vmem [shape: f32[8,8], index: 4, kind: input, shape index: {}]
  %s5 = inlined_call_operand.hbm [shape: f32[8,32], index: 5, kind: output, shape index: {}]
  %s6 = sld [smem:[#allocation0]]
  $region38: #{tpu_custom_call.1} parent=0
    _
  %s8 = ssub.s32 1, %s6
  %s9 = scalar_select 0, %s8, %s6
  $region1: #{tpu_custom_call.1} parent=0
    #allocation3 [shape = 'u8[4096]{0}', space=vmem, size = 0x1000, scoped, tag = 'input window, operand 0, single buffered']
    #allocation4 [shape = 's32[1]{0}', space=sflag, size = 0x4, scoped, tag = 'scoped memory for tpu_custom_call.1']
    #allocation5 [shape = 's32[1]{0}', space=sflag, size = 0x4, scoped, tag = 'scoped memory for tpu_custom_call.1']
    #allocation6 [shape = 'u8[8192]{0}', space=vmem, size = 0x2000, scoped, tag = 'input window, operand 1, single buffered']
    #allocation7 [shape = 's32[1]{0}', space=sflag, size = 0x4, scoped, tag = 'scoped memory for tpu_custom_call.1']
    #allocation8 [shape = 'u8[4096]{0}', space=vmem, size = 0x1000, scoped, tag = 'output window, operand 0, single buffered']
    %10 = vsyncpa [#allocation4], 0
    %11 = vsyncpa [#allocation7], 0
    %12 = vsyncpa [#allocation5], 0
    // Predicated region
    $region2: #{tpu_custom_call.1} parent=1 // pred_check
      _
    $region3: #{tpu_custom_call.1} parent=1 // pred_check_branch
      %14 = sbr.rel (0) target = $region5
    $region4: #{tpu_custom_call.1} parent=1 // pred_region
      %s16 = ssub.s32 128, 128
      %17 = vsyncadd [#allocation4], %s16
      %s19 = sshll.u32 [#allocation3], 4
      %s20 = int_to_ptr.vmem [resolvable:$true] %s19
      %22 = dma.hbm_to_vmem [thread:$0]  %s0, 128, %s20, [#allocation4]
    $region5: #{tpu_custom_call.1} parent=1 // pred_fallthru
      _
    // Predicated region
    $region6: #{tpu_custom_call.1} parent=1 // pred_check
      _
    $region7: #{tpu_custom_call.1} parent=1 // pred_check_branch
      %24 = sbr.rel (0) target = $region9
    $region8: #{tpu_custom_call.1} parent=1 // pred_region
      %s26 = ssub.s32 256, 256
      %27 = vsyncadd [#allocation7], %s26
      %s28 = sshll.u32 [#allocation6], 4
      %s29 = int_to_ptr.vmem [resolvable:$true] %s28
      %34 = dma.hbm_to_vmem [thread:$0]  %s1, 256, %s29, [#allocation7], 128, 128, 8
    $region9: #{tpu_custom_call.1} parent=1 // pred_fallthru
      _
    // Predicated region
    $region10: #{tpu_custom_call.1} parent=1 // pred_check
      _
    $region11: #{tpu_custom_call.1} parent=1 // pred_check_branch
      %36 = sbr.rel (0) target = $region13
    $region12: #{tpu_custom_call.1} parent=1 // pred_region
      _
    $region13: #{tpu_custom_call.1} parent=1 // pred_fallthru
      _
    // Predicated region
    $region14: #{tpu_custom_call.1} parent=1 // pred_check
      _
    $region15: #{tpu_custom_call.1} parent=1 // pred_check_branch
      %38 = sbr.rel (0) target = $region17
    $region16: #{tpu_custom_call.1} parent=1 // pred_region
      _
    $region17: #{tpu_custom_call.1} parent=1 // pred_fallthru
      _
    // Predicated region
    $region18: #{tpu_custom_call.1} parent=1 // pred_check
      _
    $region19: #{tpu_custom_call.1} parent=1 // pred_check_branch
      %40 = sbr.rel (0) target = $region21
    $region20: #{tpu_custom_call.1} parent=1 // pred_region
      _
    $region21: #{tpu_custom_call.1} parent=1 // pred_fallthru
      _
    // Predicated region
    $region22: #{tpu_custom_call.1} parent=1 // pred_check
      _
    $region23: #{tpu_custom_call.1} parent=1 // pred_check_branch
      %42 = sbr.rel (0) target = $region25
    $region24: #{tpu_custom_call.1} parent=1 // pred_region
      %43 = dma.done [#allocation4], 128
    $region25: #{tpu_custom_call.1} parent=1 // pred_fallthru
      _
    // Predicated region
    $region26: #{tpu_custom_call.1} parent=1 // pred_check
      _
    $region27: #{tpu_custom_call.1} parent=1 // pred_check_branch
      %45 = sbr.rel (0) target = $region29
    $region28: #{tpu_custom_call.1} parent=1 // pred_region
      %46 = dma.done [#allocation7], 256
    $region29: #{tpu_custom_call.1} parent=1 // pred_fallthru
      _
    %v47 = vld [vmem:[#allocation3] sm:$0xff]
    %v48 = vld [vmem:[#allocation6] sm:$0xff]
    %v49 = vld [vmem:[#allocation6 + $0x8] sm:$0xff]
    %v50 = vld [vmem:[%s2] sm:$0x1]
    %v52 = vlaneseq
    %v53 = vshrl.u32 %v52, 7
    %v54 = vsub.s32 0, %v53
    %v55 = vrot.slane %v50, %v54
    %vm57 = vcmask 130048
    %v59 = vsel %vm57, %v47, 0
    %61 = vmatprep.subr.mxu0 0.0
    %62 = vmatpush1.msra.mxu0 %v48
    %63 = vmatprep.subr.mxu0 0.0
    %64 = vmatpush1.msra.mxu0 %v49
    %65 = vmatprep.subr.mxu0 0.0
    %66 = vmatpush1.msra.mxu0 0.0
    %67 = vmatprep.subr.mxu0 0.0
    %68 = vmatpush1.msra.mxu0 0.0
    %69 = vmatprep.subr.mxu0 0.0
    %70 = vmatpush1.msra.mxu0 0.0
    %71 = vmatprep.subr.mxu0 0.0
    %72 = vmatpush1.msra.mxu0 0.0
    %73 = vmatprep.subr.mxu0 0.0
    %74 = vmatpush1.msra.mxu0 0.0
    %75 = vmatprep.subr.mxu0 0.0
    %76 = vmatpush1.msra.mxu0 0.0
    %77 = vmatprep.subr.mxu0 0.0
    %78 = vmatpush1.msra.mxu0 0.0
    %79 = vmatprep.subr.mxu0 0.0
    %80 = vmatpush1.msra.mxu0 0.0
    %81 = vmatprep.subr.mxu0 0.0
    %82 = vmatpush1.msra.mxu0 0.0
    %83 = vmatprep.subr.mxu0 0.0
    %84 = vmatpush1.msra.mxu0 0.0
    %85 = vmatprep.subr.mxu0 0.0
    %86 = vmatpush1.msra.mxu0 0.0
    %87 = vmatprep.subr.mxu0 0.0
    %88 = vmatpush1.msra.mxu0 0.0
    %89 = vmatprep.subr.mxu0 0.0
    %90 = vmatpush1.msra.mxu0 0.0
    %91 = vmatprep.subr.mxu0 0.0
    %92 = vmatpush1.msra.mxu0 0.0
    %93 = vmatprep.subr.mxu0 0.0
    %94 = vmatpush1.msra.mxu0 0.0
    %95 = vmatprep.subr.mxu0 0.0
    %96 = vmatpush1.msra.mxu0 0.0
    %97 = vmatprep.subr.mxu0 0.0
    %98 = vmatpush1.msra.mxu0 0.0
    %99 = vmatprep.subr.mxu0 0.0
    %100 = vmatpush1.msra.mxu0 0.0
    %101 = vmatprep.subr.mxu0 0.0
    %102 = vmatpush1.msra.mxu0 0.0
    %103 = vmatprep.subr.mxu0 0.0
    %104 = vmatpush1.msra.mxu0 0.0
    %105 = vmatprep.subr.mxu0 0.0
    %106 = vmatpush1.msra.mxu0 0.0
    %107 = vmatprep.subr.mxu0 0.0
    %108 = vmatpush1.msra.mxu0 0.0
    %109 = vmatprep.subr.mxu0 0.0
    %110 = vmatpush1.msra.mxu0 0.0
    %111 = vmatprep.subr.mxu0 0.0
    %112 = vmatpush1.msra.mxu0 0.0
    %113 = vmatprep.subr.mxu0 0.0
    %114 = vmatpush1.msra.mxu0 0.0
    %115 = vmatprep.subr.mxu0 0.0
    %116 = vmatpush1.msra.mxu0 0.0
    %117 = vmatprep.subr.mxu0 0.0
    %118 = vmatpush1.msra.mxu0 0.0
    %119 = vmatprep.subr.mxu0 0.0
    %120 = vmatpush1.msra.mxu0 0.0
    %121 = vmatprep.subr.mxu0 0.0
    %122 = vmatpush1.msra.mxu0 0.0
    %123 = vmatprep.subr.mxu0 0.0
    %124 = vmatpush1.msra.mxu0 0.0
    %125 = vmatprep.mubr.f32.mxu0 0.0
    %126 = vmatmul.mubr.f32.gmra.mrb[0].mxu0 %v59
    %v127 = vpop.f32.mrb[0].mxu0
    %v128 = vadd.f32 %v55, %v127
    %v129 = vpop.f32.mrb[0].mxu0
    %130 = vdwg.mxu0
    %132 = vrot.lane.b32.xlu0 %v128, 96
    %v133 = vpop.permute.xlu0 %132
    %vm135 = vcmask 261120
    %136 = vst.msk [vmem:[#allocation2] sm:$0xff] %vm135, %v133
    %s137 = smul.u32 0, 8
    %s138 = scalar_lea.vmem [#allocation2], %s137
    %v139 = vld [vmem:[%s138] sm:$0xff]
    %v140 = vld [vmem:[%s4] sm:$0xff]
    %vm141 = vcmp.gt.f32.partialorder %v140, 0.0
    %v143 = vcombine.high %v139, %v139
    %v145 = vunpack.c.l.s4 1966171168
    %v146 = vunpack.c.0.s8 %v145
    %v147 = vlaneseq
    %v148 = vshrl.u32 %v147, 7
    %v149 = vsub.s32 %v146, %v148
    %v150 = vrot.slane %v139, %v149
    %v152 = vunpack.c.l.s4 1966171168
    %v153 = vunpack.c.0.s8 %v152
    %v154 = vlaneseq
    %v155 = vshrl.u32 %v154, 7
    %v156 = vsub.s32 %v153, %v155
    %v157 = vrot.slane %v143, %v156
    %v158 = vcombine.high %v150, %v150
    %v159 = vcombine.high %v157, %v157
    %v161 = vunpack.c.l.s4 1966171168
    %v162 = vunpack.c.0.s8 %v161
    %v163 = vlaneseq
    %v164 = vshrl.u32 %v163, 7
    %v165 = vsub.s32 %v162, %v164
    %v166 = vrot.slane %v150, %v165
    %v168 = vunpack.c.l.s4 1966171168
    %v169 = vunpack.c.0.s8 %v168
    %v170 = vlaneseq
    %v171 = vshrl.u32 %v170, 7
    %v172 = vsub.s32 %v169, %v171
    %v173 = vrot.slane %v157, %v172
    %v175 = vunpack.c.l.s4 1966171168
    %v176 = vunpack.c.0.s8 %v175
    %v177 = vlaneseq
    %v178 = vshrl.u32 %v177, 7
    %v179 = vsub.s32 %v176, %v178
    %v180 = vrot.slane %v158, %v179
    %v182 = vunpack.c.l.s4 1966171168
    %v183 = vunpack.c.0.s8 %v182
    %v184 = vlaneseq
    %v185 = vshrl.u32 %v184, 7
    %v186 = vsub.s32 %v183, %v185
    %v187 = vrot.slane %v159, %v186
    %v188 = vcombine.high %v166, %v166
    %v189 = vcombine.high %v173, %v173
    %v190 = vcombine.high %v180, %v180
    %v191 = vcombine.high %v187, %v187
    %v192 = vlaneseq
    %v193 = vshrl.u32 %v192, 7
    %v194 = vsub.s32 0, %v193
    %v195 = vrot.slane %v166, %v194
    %v196 = vlaneseq
    %v197 = vshrl.u32 %v196, 7
    %v198 = vsub.s32 0, %v197
    %v199 = vrot.slane %v180, %v198
    %v200 = vlaneseq
    %v201 = vshrl.u32 %v200, 7
    %v202 = vsub.s32 0, %v201
    %v203 = vrot.slane %v188, %v202
    %v204 = vlaneseq
    %v205 = vshrl.u32 %v204, 7
    %v206 = vsub.s32 0, %v205
    %v207 = vrot.slane %v190, %v206
    %v208 = vlaneseq
    %v209 = vshrl.u32 %v208, 7
    %v210 = vsub.s32 0, %v209
    %v211 = vrot.slane %v173, %v210
    %v212 = vlaneseq
    %v213 = vshrl.u32 %v212, 7
    %v214 = vsub.s32 0, %v213
    %v215 = vrot.slane %v187, %v214
    %v216 = vlaneseq
    %v217 = vshrl.u32 %v216, 7
    %v218 = vsub.s32 0, %v217
    %v219 = vrot.slane %v189, %v218
    %v220 = vlaneseq
    %v221 = vshrl.u32 %v220, 7
    %v222 = vsub.s32 0, %v221
    %v223 = vrot.slane %v191, %v222
    %v232 = vadd.f32 %v195, %v128
    %v233 = vadd.f32 %v199, %v128
    %v234 = vadd.f32 %v203, %v128
    %v235 = vadd.f32 %v207, %v128
    %v236 = vadd.f32 %v211, %v128
    %v237 = vadd.f32 %v215, %v128
    %v238 = vadd.f32 %v219, %v128
    %v239 = vadd.f32 %v223, %v128
    %vm240 = vcmp.gt.f32.partialorder %v232, 0.0
    %vm241 = vcmp.gt.f32.partialorder %v233, 0.0
    %vm242 = vcmp.gt.f32.partialorder %v234, 0.0
    %vm243 = vcmp.gt.f32.partialorder %v235, 0.0
    %vm244 = vcmp.gt.f32.partialorder %v236, 0.0
    %vm245 = vcmp.gt.f32.partialorder %v237, 0.0
    %vm246 = vcmp.gt.f32.partialorder %v238, 0.0
    %vm247 = vcmp.gt.f32.partialorder %v239, 0.0
    %v248 = vmul.f32 %v232, 0.2
    %v249 = vmul.f32 %v233, 0.2
    %v250 = vmul.f32 %v234, 0.2
    %v251 = vmul.f32 %v235, 0.2
    %v252 = vmul.f32 %v236, 0.2
    %v253 = vmul.f32 %v237, 0.2
    %v254 = vmul.f32 %v238, 0.2
    %v255 = vmul.f32 %v239, 0.2
    %v256 = vsel %vm240, %v232, %v248
    %v257 = vsel %vm241, %v233, %v249
    %v258 = vsel %vm242, %v234, %v250
    %v259 = vsel %vm243, %v235, %v251
    %v260 = vsel %vm244, %v236, %v252
    %v261 = vsel %vm245, %v237, %v253
    %v262 = vsel %vm246, %v238, %v254
    %v263 = vsel %vm247, %v239, %v255
    %v264 = vld [vmem:[%s3] sm:$0x1]
    %v266 = vlaneseq
    %v267 = vshrl.u32 %v266, 7
    %v268 = vsub.s32 0, %v267
    %v269 = vrot.slane %v264, %v268
    %v271 = vmul.f32 %v256, %v269
    %v272 = vmul.f32 %v257, %v269
    %v273 = vmul.f32 %v258, %v269
    %v274 = vmul.f32 %v259, %v269
    %v275 = vmul.f32 %v260, %v269
    %v276 = vmul.f32 %v261, %v269
    %v277 = vmul.f32 %v262, %v269
    %v278 = vmul.f32 %v263, %v269
    %vm279 = vcmask 64512
    %v280 = vsel %vm279, %v271, 0.0
    %281 = vadd.xlane.f32.xlu0 %v280
    %v282 = vpop.xlane.xlu0 %281
    %v283 = vsel %vm279, %v272, 0.0
    %284 = vadd.xlane.f32.xlu0 %v283
    %v285 = vpop.xlane.xlu0 %284
    %v286 = vsel %vm279, %v273, 0.0
    %287 = vadd.xlane.f32.xlu0 %v286
    %v288 = vpop.xlane.xlu0 %287
    %v289 = vsel %vm279, %v274, 0.0
    %290 = vadd.xlane.f32.xlu0 %v289
    %v291 = vpop.xlane.xlu0 %290
    %v292 = vsel %vm279, %v275, 0.0
    %293 = vadd.xlane.f32.xlu0 %v292
    %v294 = vpop.xlane.xlu0 %293
    %v295 = vsel %vm279, %v276, 0.0
    %296 = vadd.xlane.f32.xlu0 %v295
    %v297 = vpop.xlane.xlu0 %296
    %v298 = vsel %vm279, %v277, 0.0
    %299 = vadd.xlane.f32.xlu0 %v298
    %v300 = vpop.xlane.xlu0 %299
    %v301 = vsel %vm279, %v278, 0.0
    %302 = vadd.xlane.f32.xlu0 %v301
    %v303 = vpop.xlane.xlu0 %302
    %v312 = vlaneseq
    %v313 = vand.u32 %v312, 127
    %v314 = vlaneseq
    %v315 = vshrl.u32 %v314, 7
    %v316 = vsub.s32 %v313, %v315
    %v317 = vrot.slane %v282, %v316
    %v318 = vlaneseq
    %v319 = vshrl.u32 %v318, 7
    %v320 = vsub.s32 %v313, %v319
    %v321 = vrot.slane %v285, %v320
    %v322 = vlaneseq
    %v323 = vshrl.u32 %v322, 7
    %v324 = vsub.s32 %v313, %v323
    %v325 = vrot.slane %v288, %v324
    %v326 = vlaneseq
    %v327 = vshrl.u32 %v326, 7
    %v328 = vsub.s32 %v313, %v327
    %v329 = vrot.slane %v291, %v328
    %v330 = vlaneseq
    %v331 = vshrl.u32 %v330, 7
    %v332 = vsub.s32 %v313, %v331
    %v333 = vrot.slane %v294, %v332
    %v334 = vlaneseq
    %v335 = vshrl.u32 %v334, 7
    %v336 = vsub.s32 %v313, %v335
    %v337 = vrot.slane %v297, %v336
    %v338 = vlaneseq
    %v339 = vshrl.u32 %v338, 7
    %v340 = vsub.s32 %v313, %v339
    %v341 = vrot.slane %v300, %v340
    %v342 = vlaneseq
    %v343 = vshrl.u32 %v342, 7
    %v344 = vsub.s32 %v313, %v343
    %v345 = vrot.slane %v303, %v344
    %vm346 = vcmask 1041409
    %v347 = vsel %vm346, %v321, %v317
    %vm348 = vcmask 1042434
    %v349 = vsel %vm348, %v325, %v347
    %vm350 = vcmask 1043459
    %v351 = vsel %vm350, %v329, %v349
    %vm352 = vcmask 1044484
    %v353 = vsel %vm352, %v333, %v351
    %vm354 = vcmask 1045509
    %v355 = vsel %vm354, %v337, %v353
    %vm356 = vcmask 1046534
    %v357 = vsel %vm356, %v341, %v355
    %vm358 = vcmask 1047559
    %v359 = vsel %vm358, %v345, %v357
    %v361 = vsel %vm141, %v359, -1e+30
    %v362 = vsel %vm279, %v361, -inf
    %363 = vmax.xlane.f32.xlu0 %v362
    %v364 = vpop.xlane.xlu0 %363
    %v365 = vsub.f32 %v361, %v364
    %v366 = vmul.f32 %v365, 1.442695
    %v367 = vpow.pop %v366
    %v368 = vmul.f32 %v367, %v140
    %v369 = vsel %vm279, %v368, 0.0
    %370 = vadd.xlane.f32.xlu0 %v369
    %v371 = vpop.xlane.xlu0 %370
    %vm372 = vcmp.gt.f32.partialorder %v371, 0.0
    %v373 = vsel %vm372, %v371, 1.0
    %v374 = vrcp.pop %v373
    %v375 = vmul.f32 %v368, %v374
    %v377 = vsel %vm279, %v375, 0
    %379 = vmatprep.subr.mxu0 0.0
    %380 = vmatpush1.msra.mxu0 %v128
    %381 = vmatprep.subr.mxu0 0.0
    %382 = vmatpush1.msra.mxu0 0.0
    %383 = vmatprep.subr.mxu0 0.0
    %384 = vmatpush1.msra.mxu0 0.0
    %385 = vmatprep.subr.mxu0 0.0
    %386 = vmatpush1.msra.mxu0 0.0
    %387 = vmatprep.subr.mxu0 0.0
    %388 = vmatpush1.msra.mxu0 0.0
    %389 = vmatprep.subr.mxu0 0.0
    %390 = vmatpush1.msra.mxu0 0.0
    %391 = vmatprep.subr.mxu0 0.0
    %392 = vmatpush1.msra.mxu0 0.0
    %393 = vmatprep.subr.mxu0 0.0
    %394 = vmatpush1.msra.mxu0 0.0
    %395 = vmatprep.subr.mxu0 0.0
    %396 = vmatpush1.msra.mxu0 0.0
    %397 = vmatprep.subr.mxu0 0.0
    %398 = vmatpush1.msra.mxu0 0.0
    %399 = vmatprep.subr.mxu0 0.0
    %400 = vmatpush1.msra.mxu0 0.0
    %401 = vmatprep.subr.mxu0 0.0
    %402 = vmatpush1.msra.mxu0 0.0
    %403 = vmatprep.subr.mxu0 0.0
    %404 = vmatpush1.msra.mxu0 0.0
    %405 = vmatprep.subr.mxu0 0.0
    %406 = vmatpush1.msra.mxu0 0.0
    %407 = vmatprep.subr.mxu0 0.0
    %408 = vmatpush1.msra.mxu0 0.0
    %409 = vmatprep.subr.mxu0 0.0
    %410 = vmatpush1.msra.mxu0 0.0
    %411 = vmatprep.subr.mxu0 0.0
    %412 = vmatpush1.msra.mxu0 0.0
    %413 = vmatprep.subr.mxu0 0.0
    %414 = vmatpush1.msra.mxu0 0.0
    %415 = vmatprep.subr.mxu0 0.0
    %416 = vmatpush1.msra.mxu0 0.0
    %417 = vmatprep.subr.mxu0 0.0
    %418 = vmatpush1.msra.mxu0 0.0
    %419 = vmatprep.subr.mxu0 0.0
    %420 = vmatpush1.msra.mxu0 0.0
    %421 = vmatprep.subr.mxu0 0.0
    %422 = vmatpush1.msra.mxu0 0.0
    %423 = vmatprep.subr.mxu0 0.0
    %424 = vmatpush1.msra.mxu0 0.0
    %425 = vmatprep.subr.mxu0 0.0
    %426 = vmatpush1.msra.mxu0 0.0
    %427 = vmatprep.subr.mxu0 0.0
    %428 = vmatpush1.msra.mxu0 0.0
    %429 = vmatprep.subr.mxu0 0.0
    %430 = vmatpush1.msra.mxu0 0.0
    %431 = vmatprep.subr.mxu0 0.0
    %432 = vmatpush1.msra.mxu0 0.0
    %433 = vmatprep.subr.mxu0 0.0
    %434 = vmatpush1.msra.mxu0 0.0
    %435 = vmatprep.subr.mxu0 0.0
    %436 = vmatpush1.msra.mxu0 0.0
    %437 = vmatprep.subr.mxu0 0.0
    %438 = vmatpush1.msra.mxu0 0.0
    %439 = vmatprep.subr.mxu0 0.0
    %440 = vmatpush1.msra.mxu0 0.0
    %441 = vmatprep.subr.mxu0 0.0
    %442 = vmatpush1.msra.mxu0 0.0
    %443 = vmatprep.mubr.f32.mxu0 0.0
    %444 = vmatmul.mubr.f32.gmra.mrb[0].mxu0 %v377
    %v445 = vpop.f32.mrb[0].mxu0
    %v446 = vadd.f32 0.0, %v445
    %v447 = vpop.f32.mrb[0].mxu0
    %448 = vdwg.mxu0
    %457 = vrot.lane.b32.xlu0 %v271, 120
    %v458 = vpop.permute.xlu0 %457
    %459 = vrot.lane.b32.xlu0 %v272, 120
    %v460 = vpop.permute.xlu0 %459
    %461 = vrot.lane.b32.xlu0 %v273, 120
    %v462 = vpop.permute.xlu0 %461
    %463 = vrot.lane.b32.xlu0 %v274, 120
    %v464 = vpop.permute.xlu0 %463
    %465 = vrot.lane.b32.xlu0 %v275, 120
    %v466 = vpop.permute.xlu0 %465
    %467 = vrot.lane.b32.xlu0 %v276, 120
    %v468 = vpop.permute.xlu0 %467
    %469 = vrot.lane.b32.xlu0 %v277, 120
    %v470 = vpop.permute.xlu0 %469
    %471 = vrot.lane.b32.xlu0 %v278, 120
    %v472 = vpop.permute.xlu0 %471
    %v481 = vsel %vm279, %v458, 0.0
    %482 = vadd.xlane.f32.xlu0 %v481
    %v483 = vpop.xlane.xlu0 %482
    %v484 = vsel %vm279, %v460, 0.0
    %485 = vadd.xlane.f32.xlu0 %v484
    %v486 = vpop.xlane.xlu0 %485
    %v487 = vsel %vm279, %v462, 0.0
    %488 = vadd.xlane.f32.xlu0 %v487
    %v489 = vpop.xlane.xlu0 %488
    %v490 = vsel %vm279, %v464, 0.0
    %491 = vadd.xlane.f32.xlu0 %v490
    %v492 = vpop.xlane.xlu0 %491
    %v493 = vsel %vm279, %v466, 0.0
    %494 = vadd.xlane.f32.xlu0 %v493
    %v495 = vpop.xlane.xlu0 %494
    %v496 = vsel %vm279, %v468, 0.0
    %497 = vadd.xlane.f32.xlu0 %v496
    %v498 = vpop.xlane.xlu0 %497
    %v499 = vsel %vm279, %v470, 0.0
    %500 = vadd.xlane.f32.xlu0 %v499
    %v501 = vpop.xlane.xlu0 %500
    %v502 = vsel %vm279, %v472, 0.0
    %503 = vadd.xlane.f32.xlu0 %v502
    %v504 = vpop.xlane.xlu0 %503
    %v513 = vlaneseq
    %v514 = vshrl.u32 %v513, 7
    %v515 = vsub.s32 %v313, %v514
    %v516 = vrot.slane %v483, %v515
    %v517 = vlaneseq
    %v518 = vshrl.u32 %v517, 7
    %v519 = vsub.s32 %v313, %v518
    %v520 = vrot.slane %v486, %v519
    %v521 = vlaneseq
    %v522 = vshrl.u32 %v521, 7
    %v523 = vsub.s32 %v313, %v522
    %v524 = vrot.slane %v489, %v523
    %v525 = vlaneseq
    %v526 = vshrl.u32 %v525, 7
    %v527 = vsub.s32 %v313, %v526
    %v528 = vrot.slane %v492, %v527
    %v529 = vlaneseq
    %v530 = vshrl.u32 %v529, 7
    %v531 = vsub.s32 %v313, %v530
    %v532 = vrot.slane %v495, %v531
    %v533 = vlaneseq
    %v534 = vshrl.u32 %v533, 7
    %v535 = vsub.s32 %v313, %v534
    %v536 = vrot.slane %v498, %v535
    %v537 = vlaneseq
    %v538 = vshrl.u32 %v537, 7
    %v539 = vsub.s32 %v313, %v538
    %v540 = vrot.slane %v501, %v539
    %v541 = vlaneseq
    %v542 = vshrl.u32 %v541, 7
    %v543 = vsub.s32 %v313, %v542
    %v544 = vrot.slane %v504, %v543
    %v545 = vsel %vm346, %v520, %v516
    %v546 = vsel %vm348, %v524, %v545
    %v547 = vsel %vm350, %v528, %v546
    %v548 = vsel %vm352, %v532, %v547
    %v549 = vsel %vm354, %v536, %v548
    %v550 = vsel %vm356, %v540, %v549
    %v551 = vsel %vm358, %v544, %v550
    %v553 = vsel %vm141, %v551, -1e+30
    %v554 = vsel %vm279, %v553, -inf
    %555 = vmax.xlane.f32.xlu0 %v554
    %v556 = vpop.xlane.xlu0 %555
    %v557 = vsub.f32 %v553, %v556
    %v558 = vmul.f32 %v557, 1.442695
    %v559 = vpow.pop %v558
    %v560 = vmul.f32 %v559, %v140
    %v561 = vsel %vm279, %v560, 0.0
    %562 = vadd.xlane.f32.xlu0 %v561
    %v563 = vpop.xlane.xlu0 %562
    %vm564 = vcmp.gt.f32.partialorder %v563, 0.0
    %v565 = vsel %vm564, %v563, 1.0
    %v566 = vrcp.pop %v565
    %v567 = vmul.f32 %v560, %v566
    %568 = vrot.lane.b32.xlu0 %v128, 120
    %v569 = vpop.permute.xlu0 %568
    %v572 = vsel %vm279, %v567, 0
    %574 = vmatprep.subr.mxu0 0.0
    %575 = vmatpush1.msra.mxu0 %v569
    %576 = vmatprep.subr.mxu0 0.0
    %577 = vmatpush1.msra.mxu0 0.0
    %578 = vmatprep.subr.mxu0 0.0
    %579 = vmatpush1.msra.mxu0 0.0
    %580 = vmatprep.subr.mxu0 0.0
    %581 = vmatpush1.msra.mxu0 0.0
    %582 = vmatprep.subr.mxu0 0.0
    %583 = vmatpush1.msra.mxu0 0.0
    %584 = vmatprep.subr.mxu0 0.0
    %585 = vmatpush1.msra.mxu0 0.0
    %586 = vmatprep.subr.mxu0 0.0
    %587 = vmatpush1.msra.mxu0 0.0
    %588 = vmatprep.subr.mxu0 0.0
    %589 = vmatpush1.msra.mxu0 0.0
    %590 = vmatprep.subr.mxu0 0.0
    %591 = vmatpush1.msra.mxu0 0.0
    %592 = vmatprep.subr.mxu0 0.0
    %593 = vmatpush1.msra.mxu0 0.0
    %594 = vmatprep.subr.mxu0 0.0
    %595 = vmatpush1.msra.mxu0 0.0
    %596 = vmatprep.subr.mxu0 0.0
    %597 = vmatpush1.msra.mxu0 0.0
    %598 = vmatprep.subr.mxu0 0.0
    %599 = vmatpush1.msra.mxu0 0.0
    %600 = vmatprep.subr.mxu0 0.0
    %601 = vmatpush1.msra.mxu0 0.0
    %602 = vmatprep.subr.mxu0 0.0
    %603 = vmatpush1.msra.mxu0 0.0
    %604 = vmatprep.subr.mxu0 0.0
    %605 = vmatpush1.msra.mxu0 0.0
    %606 = vmatprep.subr.mxu0 0.0
    %607 = vmatpush1.msra.mxu0 0.0
    %608 = vmatprep.subr.mxu0 0.0
    %609 = vmatpush1.msra.mxu0 0.0
    %610 = vmatprep.subr.mxu0 0.0
    %611 = vmatpush1.msra.mxu0 0.0
    %612 = vmatprep.subr.mxu0 0.0
    %613 = vmatpush1.msra.mxu0 0.0
    %614 = vmatprep.subr.mxu0 0.0
    %615 = vmatpush1.msra.mxu0 0.0
    %616 = vmatprep.subr.mxu0 0.0
    %617 = vmatpush1.msra.mxu0 0.0
    %618 = vmatprep.subr.mxu0 0.0
    %619 = vmatpush1.msra.mxu0 0.0
    %620 = vmatprep.subr.mxu0 0.0
    %621 = vmatpush1.msra.mxu0 0.0
    %622 = vmatprep.subr.mxu0 0.0
    %623 = vmatpush1.msra.mxu0 0.0
    %624 = vmatprep.subr.mxu0 0.0
    %625 = vmatpush1.msra.mxu0 0.0
    %626 = vmatprep.subr.mxu0 0.0
    %627 = vmatpush1.msra.mxu0 0.0
    %628 = vmatprep.subr.mxu0 0.0
    %629 = vmatpush1.msra.mxu0 0.0
    %630 = vmatprep.subr.mxu0 0.0
    %631 = vmatpush1.msra.mxu0 0.0
    %632 = vmatprep.subr.mxu0 0.0
    %633 = vmatpush1.msra.mxu0 0.0
    %634 = vmatprep.subr.mxu0 0.0
    %635 = vmatpush1.msra.mxu0 0.0
    %636 = vmatprep.subr.mxu0 0.0
    %637 = vmatpush1.msra.mxu0 0.0
    %638 = vmatprep.mubr.f32.mxu0 0.0
    %639 = vmatmul.mubr.f32.gmra.mrb[0].mxu0 %v572
    %v640 = vpop.f32.mrb[0].mxu0
    %v641 = vadd.f32 0.0, %v640
    %v642 = vpop.f32.mrb[0].mxu0
    %643 = vdwg.mxu0
    %644 = vrot.lane.b32.xlu0 %v271, 112
    %v645 = vpop.permute.xlu0 %644
    %646 = vrot.lane.b32.xlu0 %v272, 112
    %v647 = vpop.permute.xlu0 %646
    %648 = vrot.lane.b32.xlu0 %v273, 112
    %v649 = vpop.permute.xlu0 %648
    %650 = vrot.lane.b32.xlu0 %v274, 112
    %v651 = vpop.permute.xlu0 %650
    %652 = vrot.lane.b32.xlu0 %v275, 112
    %v653 = vpop.permute.xlu0 %652
    %654 = vrot.lane.b32.xlu0 %v276, 112
    %v655 = vpop.permute.xlu0 %654
    %656 = vrot.lane.b32.xlu0 %v277, 112
    %v657 = vpop.permute.xlu0 %656
    %658 = vrot.lane.b32.xlu0 %v278, 112
    %v659 = vpop.permute.xlu0 %658
    %v668 = vsel %vm279, %v645, 0.0
    %669 = vadd.xlane.f32.xlu0 %v668
    %v670 = vpop.xlane.xlu0 %669
    %v671 = vsel %vm279, %v647, 0.0
    %672 = vadd.xlane.f32.xlu0 %v671
    %v673 = vpop.xlane.xlu0 %672
    %v674 = vsel %vm279, %v649, 0.0
    %675 = vadd.xlane.f32.xlu0 %v674
    %v676 = vpop.xlane.xlu0 %675
    %v677 = vsel %vm279, %v651, 0.0
    %678 = vadd.xlane.f32.xlu0 %v677
    %v679 = vpop.xlane.xlu0 %678
    %v680 = vsel %vm279, %v653, 0.0
    %681 = vadd.xlane.f32.xlu0 %v680
    %v682 = vpop.xlane.xlu0 %681
    %v683 = vsel %vm279, %v655, 0.0
    %684 = vadd.xlane.f32.xlu0 %v683
    %v685 = vpop.xlane.xlu0 %684
    %v686 = vsel %vm279, %v657, 0.0
    %687 = vadd.xlane.f32.xlu0 %v686
    %v688 = vpop.xlane.xlu0 %687
    %v689 = vsel %vm279, %v659, 0.0
    %690 = vadd.xlane.f32.xlu0 %v689
    %v691 = vpop.xlane.xlu0 %690
    %v700 = vlaneseq
    %v701 = vshrl.u32 %v700, 7
    %v702 = vsub.s32 %v313, %v701
    %v703 = vrot.slane %v670, %v702
    %v704 = vlaneseq
    %v705 = vshrl.u32 %v704, 7
    %v706 = vsub.s32 %v313, %v705
    %v707 = vrot.slane %v673, %v706
    %v708 = vlaneseq
    %v709 = vshrl.u32 %v708, 7
    %v710 = vsub.s32 %v313, %v709
    %v711 = vrot.slane %v676, %v710
    %v712 = vlaneseq
    %v713 = vshrl.u32 %v712, 7
    %v714 = vsub.s32 %v313, %v713
    %v715 = vrot.slane %v679, %v714
    %v716 = vlaneseq
    %v717 = vshrl.u32 %v716, 7
    %v718 = vsub.s32 %v313, %v717
    %v719 = vrot.slane %v682, %v718
    %v720 = vlaneseq
    %v721 = vshrl.u32 %v720, 7
    %v722 = vsub.s32 %v313, %v721
    %v723 = vrot.slane %v685, %v722
    %v724 = vlaneseq
    %v725 = vshrl.u32 %v724, 7
    %v726 = vsub.s32 %v313, %v725
    %v727 = vrot.slane %v688, %v726
    %v728 = vlaneseq
    %v729 = vshrl.u32 %v728, 7
    %v730 = vsub.s32 %v313, %v729
    %v731 = vrot.slane %v691, %v730
    %v732 = vsel %vm346, %v707, %v703
    %v733 = vsel %vm348, %v711, %v732
    %v734 = vsel %vm350, %v715, %v733
    %v735 = vsel %vm352, %v719, %v734
    %v736 = vsel %vm354, %v723, %v735
    %v737 = vsel %vm356, %v727, %v736
    %v738 = vsel %vm358, %v731, %v737
    %v740 = vsel %vm141, %v738, -1e+30
    %v741 = vsel %vm279, %v740, -inf
    %742 = vmax.xlane.f32.xlu0 %v741
    %v743 = vpop.xlane.xlu0 %742
    %v744 = vsub.f32 %v740, %v743
    %v745 = vmul.f32 %v744, 1.442695
    %v746 = vpow.pop %v745
    %v747 = vmul.f32 %v746, %v140
    %v748 = vsel %vm279, %v747, 0.0
    %749 = vadd.xlane.f32.xlu0 %v748
    %v750 = vpop.xlane.xlu0 %749
    %vm751 = vcmp.gt.f32.partialorder %v750, 0.0
    %v752 = vsel %vm751, %v750, 1.0
    %v753 = vrcp.pop %v752
    %v754 = vmul.f32 %v747, %v753
    %755 = vrot.lane.b32.xlu0 %v128, 112
    %v756 = vpop.permute.xlu0 %755
    %v759 = vsel %vm279, %v754, 0
    %761 = vmatprep.subr.mxu0 0.0
    %762 = vmatpush1.msra.mxu0 %v756
    %763 = vmatprep.subr.mxu0 0.0
    %764 = vmatpush1.msra.mxu0 0.0
    %765 = vmatprep.subr.mxu0 0.0
    %766 = vmatpush1.msra.mxu0 0.0
    %767 = vmatprep.subr.mxu0 0.0
    %768 = vmatpush1.msra.mxu0 0.0
    %769 = vmatprep.subr.mxu0 0.0
    %770 = vmatpush1.msra.mxu0 0.0
    %771 = vmatprep.subr.mxu0 0.0
    %772 = vmatpush1.msra.mxu0 0.0
    %773 = vmatprep.subr.mxu0 0.0
    %774 = vmatpush1.msra.mxu0 0.0
    %775 = vmatprep.subr.mxu0 0.0
    %776 = vmatpush1.msra.mxu0 0.0
    %777 = vmatprep.subr.mxu0 0.0
    %778 = vmatpush1.msra.mxu0 0.0
    %779 = vmatprep.subr.mxu0 0.0
    %780 = vmatpush1.msra.mxu0 0.0
    %781 = vmatprep.subr.mxu0 0.0
    %782 = vmatpush1.msra.mxu0 0.0
    %783 = vmatprep.subr.mxu0 0.0
    %784 = vmatpush1.msra.mxu0 0.0
    %785 = vmatprep.subr.mxu0 0.0
    %786 = vmatpush1.msra.mxu0 0.0
    %787 = vmatprep.subr.mxu0 0.0
    %788 = vmatpush1.msra.mxu0 0.0
    %789 = vmatprep.subr.mxu0 0.0
    %790 = vmatpush1.msra.mxu0 0.0
    %791 = vmatprep.subr.mxu0 0.0
    %792 = vmatpush1.msra.mxu0 0.0
    %793 = vmatprep.subr.mxu0 0.0
    %794 = vmatpush1.msra.mxu0 0.0
    %795 = vmatprep.subr.mxu0 0.0
    %796 = vmatpush1.msra.mxu0 0.0
    %797 = vmatprep.subr.mxu0 0.0
    %798 = vmatpush1.msra.mxu0 0.0
    %799 = vmatprep.subr.mxu0 0.0
    %800 = vmatpush1.msra.mxu0 0.0
    %801 = vmatprep.subr.mxu0 0.0
    %802 = vmatpush1.msra.mxu0 0.0
    %803 = vmatprep.subr.mxu0 0.0
    %804 = vmatpush1.msra.mxu0 0.0
    %805 = vmatprep.subr.mxu0 0.0
    %806 = vmatpush1.msra.mxu0 0.0
    %807 = vmatprep.subr.mxu0 0.0
    %808 = vmatpush1.msra.mxu0 0.0
    %809 = vmatprep.subr.mxu0 0.0
    %810 = vmatpush1.msra.mxu0 0.0
    %811 = vmatprep.subr.mxu0 0.0
    %812 = vmatpush1.msra.mxu0 0.0
    %813 = vmatprep.subr.mxu0 0.0
    %814 = vmatpush1.msra.mxu0 0.0
    %815 = vmatprep.subr.mxu0 0.0
    %816 = vmatpush1.msra.mxu0 0.0
    %817 = vmatprep.subr.mxu0 0.0
    %818 = vmatpush1.msra.mxu0 0.0
    %819 = vmatprep.subr.mxu0 0.0
    %820 = vmatpush1.msra.mxu0 0.0
    %821 = vmatprep.subr.mxu0 0.0
    %822 = vmatpush1.msra.mxu0 0.0
    %823 = vmatprep.subr.mxu0 0.0
    %824 = vmatpush1.msra.mxu0 0.0
    %825 = vmatprep.mubr.f32.mxu0 0.0
    %826 = vmatmul.mubr.f32.gmra.mrb[0].mxu0 %v759
    %v827 = vpop.f32.mrb[0].mxu0
    %v828 = vadd.f32 0.0, %v827
    %v829 = vpop.f32.mrb[0].mxu0
    %830 = vdwg.mxu0
    %831 = vrot.lane.b32.xlu0 %v271, 104
    %v832 = vpop.permute.xlu0 %831
    %833 = vrot.lane.b32.xlu0 %v272, 104
    %v834 = vpop.permute.xlu0 %833
    %835 = vrot.lane.b32.xlu0 %v273, 104
    %v836 = vpop.permute.xlu0 %835
    %837 = vrot.lane.b32.xlu0 %v274, 104
    %v838 = vpop.permute.xlu0 %837
    %839 = vrot.lane.b32.xlu0 %v275, 104
    %v840 = vpop.permute.xlu0 %839
    %841 = vrot.lane.b32.xlu0 %v276, 104
    %v842 = vpop.permute.xlu0 %841
    %843 = vrot.lane.b32.xlu0 %v277, 104
    %v844 = vpop.permute.xlu0 %843
    %845 = vrot.lane.b32.xlu0 %v278, 104
    %v846 = vpop.permute.xlu0 %845
    %v855 = vsel %vm279, %v832, 0.0
    %856 = vadd.xlane.f32.xlu0 %v855
    %v857 = vpop.xlane.xlu0 %856
    %v858 = vsel %vm279, %v834, 0.0
    %859 = vadd.xlane.f32.xlu0 %v858
    %v860 = vpop.xlane.xlu0 %859
    %v861 = vsel %vm279, %v836, 0.0
    %862 = vadd.xlane.f32.xlu0 %v861
    %v863 = vpop.xlane.xlu0 %862
    %v864 = vsel %vm279, %v838, 0.0
    %865 = vadd.xlane.f32.xlu0 %v864
    %v866 = vpop.xlane.xlu0 %865
    %v867 = vsel %vm279, %v840, 0.0
    %868 = vadd.xlane.f32.xlu0 %v867
    %v869 = vpop.xlane.xlu0 %868
    %v870 = vsel %vm279, %v842, 0.0
    %871 = vadd.xlane.f32.xlu0 %v870
    %v872 = vpop.xlane.xlu0 %871
    %v873 = vsel %vm279, %v844, 0.0
    %874 = vadd.xlane.f32.xlu0 %v873
    %v875 = vpop.xlane.xlu0 %874
    %v876 = vsel %vm279, %v846, 0.0
    %877 = vadd.xlane.f32.xlu0 %v876
    %v878 = vpop.xlane.xlu0 %877
    %v887 = vlaneseq
    %v888 = vshrl.u32 %v887, 7
    %v889 = vsub.s32 %v313, %v888
    %v890 = vrot.slane %v857, %v889
    %v891 = vlaneseq
    %v892 = vshrl.u32 %v891, 7
    %v893 = vsub.s32 %v313, %v892
    %v894 = vrot.slane %v860, %v893
    %v895 = vlaneseq
    %v896 = vshrl.u32 %v895, 7
    %v897 = vsub.s32 %v313, %v896
    %v898 = vrot.slane %v863, %v897
    %v899 = vlaneseq
    %v900 = vshrl.u32 %v899, 7
    %v901 = vsub.s32 %v313, %v900
    %v902 = vrot.slane %v866, %v901
    %v903 = vlaneseq
    %v904 = vshrl.u32 %v903, 7
    %v905 = vsub.s32 %v313, %v904
    %v906 = vrot.slane %v869, %v905
    %v907 = vlaneseq
    %v908 = vshrl.u32 %v907, 7
    %v909 = vsub.s32 %v313, %v908
    %v910 = vrot.slane %v872, %v909
    %v911 = vlaneseq
    %v912 = vshrl.u32 %v911, 7
    %v913 = vsub.s32 %v313, %v912
    %v914 = vrot.slane %v875, %v913
    %v915 = vlaneseq
    %v916 = vshrl.u32 %v915, 7
    %v917 = vsub.s32 %v313, %v916
    %v918 = vrot.slane %v878, %v917
    %v919 = vsel %vm346, %v894, %v890
    %v920 = vsel %vm348, %v898, %v919
    %v921 = vsel %vm350, %v902, %v920
    %v922 = vsel %vm352, %v906, %v921
    %v923 = vsel %vm354, %v910, %v922
    %v924 = vsel %vm356, %v914, %v923
    %v925 = vsel %vm358, %v918, %v924
    %v927 = vsel %vm141, %v925, -1e+30
    %v928 = vsel %vm279, %v927, -inf
    %929 = vmax.xlane.f32.xlu0 %v928
    %v930 = vpop.xlane.xlu0 %929
    %v931 = vsub.f32 %v927, %v930
    %v932 = vmul.f32 %v931, 1.442695
    %v933 = vpow.pop %v932
    %v934 = vmul.f32 %v933, %v140
    %v935 = vsel %vm279, %v934, 0.0
    %936 = vadd.xlane.f32.xlu0 %v935
    %v937 = vpop.xlane.xlu0 %936
    %vm938 = vcmp.gt.f32.partialorder %v937, 0.0
    %v939 = vsel %vm938, %v937, 1.0
    %v940 = vrcp.pop %v939
    %v941 = vmul.f32 %v934, %v940
    %942 = vrot.lane.b32.xlu0 %v128, 104
    %v943 = vpop.permute.xlu0 %942
    %v946 = vsel %vm279, %v941, 0
    %948 = vmatprep.subr.mxu0 0.0
    %949 = vmatpush1.msra.mxu0 %v943
    %950 = vmatprep.subr.mxu0 0.0
    %951 = vmatpush1.msra.mxu0 0.0
    %952 = vmatprep.subr.mxu0 0.0
    %953 = vmatpush1.msra.mxu0 0.0
    %954 = vmatprep.subr.mxu0 0.0
    %955 = vmatpush1.msra.mxu0 0.0
    %956 = vmatprep.subr.mxu0 0.0
    %957 = vmatpush1.msra.mxu0 0.0
    %958 = vmatprep.subr.mxu0 0.0
    %959 = vmatpush1.msra.mxu0 0.0
    %960 = vmatprep.subr.mxu0 0.0
    %961 = vmatpush1.msra.mxu0 0.0
    %962 = vmatprep.subr.mxu0 0.0
    %963 = vmatpush1.msra.mxu0 0.0
    %964 = vmatprep.subr.mxu0 0.0
    %965 = vmatpush1.msra.mxu0 0.0
    %966 = vmatprep.subr.mxu0 0.0
    %967 = vmatpush1.msra.mxu0 0.0
    %968 = vmatprep.subr.mxu0 0.0
    %969 = vmatpush1.msra.mxu0 0.0
    %970 = vmatprep.subr.mxu0 0.0
    %971 = vmatpush1.msra.mxu0 0.0
    %972 = vmatprep.subr.mxu0 0.0
    %973 = vmatpush1.msra.mxu0 0.0
    %974 = vmatprep.subr.mxu0 0.0
    %975 = vmatpush1.msra.mxu0 0.0
    %976 = vmatprep.subr.mxu0 0.0
    %977 = vmatpush1.msra.mxu0 0.0
    %978 = vmatprep.subr.mxu0 0.0
    %979 = vmatpush1.msra.mxu0 0.0
    %980 = vmatprep.subr.mxu0 0.0
    %981 = vmatpush1.msra.mxu0 0.0
    %982 = vmatprep.subr.mxu0 0.0
    %983 = vmatpush1.msra.mxu0 0.0
    %984 = vmatprep.subr.mxu0 0.0
    %985 = vmatpush1.msra.mxu0 0.0
    %986 = vmatprep.subr.mxu0 0.0
    %987 = vmatpush1.msra.mxu0 0.0
    %988 = vmatprep.subr.mxu0 0.0
    %989 = vmatpush1.msra.mxu0 0.0
    %990 = vmatprep.subr.mxu0 0.0
    %991 = vmatpush1.msra.mxu0 0.0
    %992 = vmatprep.subr.mxu0 0.0
    %993 = vmatpush1.msra.mxu0 0.0
    %994 = vmatprep.subr.mxu0 0.0
    %995 = vmatpush1.msra.mxu0 0.0
    %996 = vmatprep.subr.mxu0 0.0
    %997 = vmatpush1.msra.mxu0 0.0
    %998 = vmatprep.subr.mxu0 0.0
    %999 = vmatpush1.msra.mxu0 0.0
    %1000 = vmatprep.subr.mxu0 0.0
    %1001 = vmatpush1.msra.mxu0 0.0
    %1002 = vmatprep.subr.mxu0 0.0
    %1003 = vmatpush1.msra.mxu0 0.0
    %1004 = vmatprep.subr.mxu0 0.0
    %1005 = vmatpush1.msra.mxu0 0.0
    %1006 = vmatprep.subr.mxu0 0.0
    %1007 = vmatpush1.msra.mxu0 0.0
    %1008 = vmatprep.subr.mxu0 0.0
    %1009 = vmatpush1.msra.mxu0 0.0
    %1010 = vmatprep.subr.mxu0 0.0
    %1011 = vmatpush1.msra.mxu0 0.0
    %1012 = vmatprep.mubr.f32.mxu0 0.0
    %1013 = vmatmul.mubr.f32.gmra.mrb[0].mxu0 %v946
    %v1014 = vpop.f32.mrb[0].mxu0
    %v1015 = vadd.f32 0.0, %v1014
    %v1016 = vpop.f32.mrb[0].mxu0
    %1017 = vdwg.mxu0
    %1019 = vrot.lane.b32.xlu0 %v641, 8
    %v1020 = vpop.permute.xlu0 %1019
    %1023 = vrot.lane.b32.xlu0 %v828, 16
    %v1024 = vpop.permute.xlu0 %1023
    %1027 = vrot.lane.b32.xlu0 %v1015, 24
    %v1028 = vpop.permute.xlu0 %1027
    %v1030 = vsel %vm279, %v446, %v1020
    %v1031 = vsel %vm57, %v1030, %v1024
    %vm1032 = vcmask 195584
    %v1033 = vsel %vm1032, %v1031, %v1028
    %vm1034 = vcmp.gt.f32.partialorder %v1033, 0.0
    %v1035 = vmul.f32 %v1033, 0.01
    %v1036 = vsel %vm1034, %v1033, %v1035
    %1037 = vst.msk [vmem:[#allocation8] sm:$0xff] %vm135, %v1036
    // Predicated region
    $region30: #{tpu_custom_call.1} parent=1 // pred_check
      _
    $region31: #{tpu_custom_call.1} parent=1 // pred_check_branch
      %1039 = sbr.rel (0) target = $region33
    $region32: #{tpu_custom_call.1} parent=1 // pred_region
      %s1041 = ssub.s32 128, 128
      %1042 = vsyncadd [#allocation5], %s1041
      %s1044 = sshll.u32 [#allocation8], 4
      %s1045 = int_to_ptr.vmem [resolvable:$true] %s1044
      %1047 = dma.vmem_to_hbm [thread:$0]  %s1045, 128, %s5, [#allocation5]
    $region33: #{tpu_custom_call.1} parent=1 // pred_fallthru
      _
    // Predicated region
    $region34: #{tpu_custom_call.1} parent=1 // pred_check
      _
    $region35: #{tpu_custom_call.1} parent=1 // pred_check_branch
      %1049 = sbr.rel (0) target = $region37
    $region36: #{tpu_custom_call.1} parent=1 // pred_region
      %1050 = dma.done [#allocation5], 128
    $region37: #{tpu_custom_call.1} parent=1 // pred_fallthru
      _
    %1051 = vsyncpa [#allocation4], 1
    %1052 = vsyncpa [#allocation7], 1
    %1053 = vsyncpa [#allocation5], 1

</llo_original>
